<compile_context>
chip_gen: v7x
topology: tpu7x:2x2x1
jax: 0.10.0
libtpu: 0.0.40
codegen_flags: <defaults>
</compile_context>

<pallas_src>
import jax
import jax.numpy as jnp
from jax.experimental import pallas as pl
from jax.experimental.pallas import tpu as pltpu

LANE = 128
OUT_W = 128  # padded combined head width (64 z cols + 1 s col + zero pad)


# ----------------------------- sizing helpers -----------------------------
def _round_up(n, m):
    return ((n + m - 1) // m) * m


def _physical_vmem_bytes():
    """Per-core VMEM of the attached TPU generation (conservative fallback 64 MiB)."""
    try:
        kind = jax.devices()[0].device_kind.lower()
    except Exception:
        return 64 << 20
    if "v7" in kind or "7x" in kind:
        return 64 << 20          # v7x: 64 MiB per TensorCore
    if "v2" in kind or "v3" in kind:
        return 16 << 20
    return 128 << 20             # v4 / v5e / v6e


def _tile_options(n, cap):
    """Multiples of 128 that divide n and are <= cap, descending. n is a multiple of 128."""
    cap = max(int(cap), LANE)
    return sorted([t for t in range(LANE, min(n, cap) + 1, LANE) if n % t == 0],
                  reverse=True)


def _proj_footprint(tm, tkf):
    return (2 * tm * tkf * 2        # x tile, bf16, double-buffered
            + 2 * tkf * OUT_W * 2   # w_cat tile, bf16, double-buffered
            + 2 * tm * OUT_W * 2    # xw output tile, bf16, double-buffered
            + tm * OUT_W * 4)       # f32 accumulator scratch


def _agg_footprint(tm, tk, n_pad, xw_resident):
    xw = 2 * n_pad * OUT_W * 2 if xw_resident else 2 * tk * OUT_W * 2
    return (2 * tm * tk * 2                           # A tile, bf16, double-buffered
            + xw
            + 2 * tm * OUT_W * 4                      # f32 output tile, double-buffered
            + tm * OUT_W * 4                          # f32 accumulator scratch
            + 2 * (OUT_W * OUT_W * 4 + 2 * OUT_W * 4))  # W_post + biases (double-buffered)


# ---------------- kernel 1: shared feature projection  xw = x @ W_cat ----------------
def project_kernel(x_ref, wcat_ref, xw_ref, acc_ref):
    k = pl.program_id(1)

    @pl.when(k == 0)
    def _():
        acc_ref[...] = jnp.zeros_like(acc_ref)

    acc_ref[...] += jnp.dot(x_ref[...], wcat_ref[...], preferred_element_type=jnp.float32)

    @pl.when(k == pl.num_programs(1) - 1)
    def _():
        xw_ref[...] = acc_ref[...].astype(xw_ref.dtype)


# ------- kernel 2: fused aggregation + heads  out = (A_hat @ xw + b_cat) @ W_post + b_out -------
def _make_aggregate_kernel(tk, xw_resident):
    def kernel(a_ref, xw_ref, bias_ref, wpost_ref, bout_ref, out_ref, acc_ref):
        k = pl.program_id(1)

        @pl.when(k == 0)
        def _():
            acc_ref[...] = jnp.zeros_like(acc_ref)

        if xw_resident:
            # xw is VMEM-resident for the whole grid; slice the k-th reduction chunk in-kernel.
            start = pl.multiple_of(k * tk, LANE)
            xw_blk = xw_ref[pl.ds(start, tk), :]
        else:
            xw_blk = xw_ref[...]

        # dominant cost: bf16 MXU matmul, f32 accumulation
        acc_ref[...] += jnp.dot(a_ref[...], xw_blk, preferred_element_type=jnp.float32)

        @pl.when(k == pl.num_programs(1) - 1)
        def _():
            # cols 0:64 = z (+ b_gnn), col 64 = s (+ b_est)
            sz = acc_ref[...] + bias_ref[...]
            # W_post col 0 applies the classifier (z @ w_cls), col 1 passes s through;
            # b_out adds b_cls to col 0. Single lane-dense [TM, 128] store.
            out_ref[...] = (
                jnp.dot(sz, wpost_ref[...], preferred_element_type=jnp.float32)
                + bout_ref[...]
            )

    return kernel


def fairgnn_forward(a_hat, x, w_est, b_est, w_gnn, b_gnn, w_cls, b_cls,
                    *, tm_pref=1024, tk_pref=8192):
    N, F = x.shape
    H = w_gnn.shape[1]
    assert H + 1 <= OUT_W, "combined head width must fit in one 128-lane slab"

    # Pad toward the intended tile granularity (not just 128) so tile sizes never degenerate.
    n_align = 512 if N >= 1024 else LANE
    f_align = 512 if F >= 1024 else LANE
    N_pad = _round_up(N, n_align)
    F_pad = _round_up(F, f_align)

    # Generation-aware VMEM budget: ~100 MiB on 128 MiB parts, ~40 MiB on v7x (64 MiB part).
    phys = _physical_vmem_bytes()
    budget = int(min(100 << 20, max(phys - (24 << 20), phys // 2)))
    tile_budget = max(budget - (4 << 20), budget // 2)   # margin for compiler-internal scratch

    # zero-pad graph / features (padded rows/cols contribute nothing, sliced off at the end)
    a_pad = jnp.zeros((N_pad, N_pad), jnp.float32).at[:N, :N].set(a_hat)
    x_pad = jnp.zeros((N_pad, F_pad), jnp.float32).at[:N, :F].set(x)

    # fuse estimator + GNN heads into one 128-wide projection
    w_cat = jnp.zeros((F_pad, OUT_W), jnp.float32)
    w_cat = w_cat.at[:F, :H].set(w_gnn).at[:F, H].set(w_est[:, 0])

    bias_cat = jnp.zeros((1, OUT_W), jnp.float32)
    bias_cat = bias_cat.at[0, :H].set(b_gnn.reshape(-1)).at[0, H].set(b_est.reshape(-1)[0])

    # finalize matrix: col 0 <- z @ w_cls (classifier), col 1 <- s (pass-through)
    w_post = jnp.zeros((OUT_W, OUT_W), jnp.float32)
    w_post = w_post.at[:H, 0].set(w_cls[:, 0]).at[H, 1].set(1.0)
    b_out = jnp.zeros((1, OUT_W), jnp.float32).at[0, 0].set(b_cls.reshape(-1)[0])

    # bf16 MXU inputs, f32 accumulation
    a_bf = a_pad.astype(jnp.bfloat16)
    x_bf = x_pad.astype(jnp.bfloat16)
    wcat_bf = w_cat.astype(jnp.bfloat16)

    # ---- tile selection, kernel 1 (decoupled from kernel 2; reduces over F) ----
    tm1_cap = max(LANE, N_pad // 2) if N_pad >= 2 * LANE else N_pad
    TM1, TKF, best1 = LANE, LANE, -1
    for tm in _tile_options(N_pad, min(1024, tm1_cap)):
        for tkf in _tile_options(F_pad, 2048):
            if _proj_footprint(tm, tkf) <= tile_budget and tm * tkf > best1:
                best1, TM1, TKF = tm * tkf, tm, tkf

    # ---- tile selection, kernel 2 (the HBM-bound A_hat contraction) ----
    xw_resident = (2 * N_pad * OUT_W * 2) <= min(16 << 20, tile_budget // 3)
    tm_cap = max(LANE, N_pad // 2) if N_pad >= 2 * LANE else N_pad  # >=2 row tiles (v7x dual-TC)
    TM, TK, best2 = LANE, LANE, (-1, -1)
    for tm in _tile_options(N_pad, min(tm_pref, tm_cap)):
        for tk in _tile_options(N_pad, tk_pref):
            if _agg_footprint(tm, tk, N_pad, xw_resident) <= tile_budget:
                score = (tm * tk, tk)   # maximize tile area, tie-break on larger (contiguous) TK
                if score > best2:
                    best2, TM, TK = score, tm, tk

    # ---- kernel 1: xw = x @ W_cat (computed once, shared by both heads) ----
    xw = pl.pallas_call(
        project_kernel,
        out_shape=jax.ShapeDtypeStruct((N_pad, OUT_W), jnp.bfloat16),
        grid=(N_pad // TM1, F_pad // TKF),
        in_specs=[
            pl.BlockSpec((TM1, TKF), lambda i, k: (i, k)),
            pl.BlockSpec((TKF, OUT_W), lambda i, k: (k, 0)),
        ],
        out_specs=pl.BlockSpec((TM1, OUT_W), lambda i, k: (i, 0)),
        scratch_shapes=[pltpu.VMEM((TM1, OUT_W), jnp.float32)],
        compiler_params=pltpu.CompilerParams(
            dimension_semantics=("parallel", "arbitrary"),
            vmem_limit_bytes=budget,
        ),
    )(x_bf, wcat_bf)

    # ---- kernel 2: out = (A_hat @ xw + bias_cat) @ W_post + b_out ----
    if xw_resident:
        # whole xw stays in VMEM across the grid (constant block index -> fetched once)
        xw_spec = pl.BlockSpec((N_pad, OUT_W), lambda i, k: (0, 0))
    else:
        xw_spec = pl.BlockSpec((TK, OUT_W), lambda i, k: (k, 0))

    out = pl.pallas_call(
        _make_aggregate_kernel(TK, xw_resident),
        out_shape=jax.ShapeDtypeStruct((N_pad, OUT_W), jnp.float32),
        grid=(N_pad // TM, N_pad // TK),
        in_specs=[
            pl.BlockSpec((TM, TK), lambda i, k: (i, k)),        # A_hat tile
            xw_spec,                                            # xw (resident or streamed)
            pl.BlockSpec((1, OUT_W), lambda i, k: (0, 0)),      # bias_cat
            pl.BlockSpec((OUT_W, OUT_W), lambda i, k: (0, 0)),  # W_post
            pl.BlockSpec((1, OUT_W), lambda i, k: (0, 0)),      # b_out
        ],
        out_specs=pl.BlockSpec((TM, OUT_W), lambda i, k: (i, 0)),
        scratch_shapes=[pltpu.VMEM((TM, OUT_W), jnp.float32)],
        compiler_params=pltpu.CompilerParams(
            dimension_semantics=("parallel", "arbitrary"),
            vmem_limit_bytes=budget,
        ),
    )(a_bf, xw, bias_cat, w_post, b_out)

    y = out[:N, 0:1]
    s = out[:N, 1:2]
    return y, s


def build_normalized_adjacency(edge_index, num_nodes):
    """Dense D^-1/2 (A + I) D^-1/2, matching torch_geometric GCNConv defaults
    (self-loops only added where missing, so an explicit self-loop keeps weight 1)."""
    src, dst = edge_index
    adj = jnp.zeros((num_nodes, num_nodes), jnp.float32)
    adj = adj.at[src, dst].set(1.0)
    adj = jnp.maximum(adj, jnp.eye(num_nodes, dtype=jnp.float32))  # add remaining self loops
    deg = jnp.sum(adj, axis=1)
    dinv = jnp.where(deg > 0, 1.0 / jnp.sqrt(deg), 0.0)
    return dinv[:, None] * adj * dinv[None, :]


if __name__ == "__main__":
    # small deterministic problem (non-128-aligned to exercise padding)
    N = 200   # number of graph nodes
    F = 96    # nfeat
    H = 64    # args.num_hidden (fixed to 64 in FairGNN.__init__)

    key = jax.random.PRNGKey(0)
    k_x, k_e, k_we, k_wg, k_wc, k_bc = jax.random.split(key, 6)

    # node features
    x = jax.random.normal(k_x, (N, F), dtype=jnp.float32)

    # deterministic undirected edge set (ring + random chords)
    src = jnp.arange(N, dtype=jnp.int32)
    dst = (src + 1) % N
    extra_src = jax.random.randint(k_e, (64,), 0, N, dtype=jnp.int32)
    extra_dst = (extra_src + 7) % N
    src_all = jnp.concatenate([src, dst, extra_src, extra_dst])
    dst_all = jnp.concatenate([dst, src, extra_dst, extra_src])
    edge_index = (src_all, dst_all)

    a_hat = build_normalized_adjacency(edge_index, N)

    # deterministic parameter init (shapes per module __init__)
    w_est = jax.random.normal(k_we, (F, 1), dtype=jnp.float32) * 0.1   # GCNConv(nfeat, 1)
    b_est = jnp.zeros((1, 1), jnp.float32)
    w_gnn = jax.random.normal(k_wg, (F, H), dtype=jnp.float32) * 0.1   # GCNConv(nfeat, 64)
    b_gnn = jnp.zeros((1, H), jnp.float32)
    w_cls = jax.random.normal(k_wc, (H, 1), dtype=jnp.float32) * 0.1   # Linear(64, 1)
    b_cls = jax.random.normal(k_bc, (1, 1), dtype=jnp.float32) * 0.1

    y, s = fairgnn_forward(a_hat, x, w_est, b_est, w_gnn, b_gnn, w_cls, b_cls)
    jax.block_until_ready((y, s))

    # reference check in plain f32 JAX (kernel uses bf16 MXU inputs with f32 accumulation,
    # so the tolerance is loosened accordingly)
    s_ref = a_hat @ (x @ w_est) + b_est
    z_ref = a_hat @ (x @ w_gnn) + b_gnn
    y_ref = z_ref @ w_cls + b_cls
    assert y.shape == (N, 1) and s.shape == (N, 1)
    assert jnp.allclose(y, y_ref, atol=5e-2, rtol=5e-2), "classifier output mismatch"
    assert jnp.allclose(s, s_ref, atol=5e-2, rtol=5e-2), "estimator output mismatch"

    print("KERNEL_OK")
</pallas_src>

<mosaic_0001>
module attributes {stable_mosaic.version = 11 : i64} {
  func.func @project_kernel(%arg0: i32, %arg1: i32, %arg2: memref<128x128xbf16, #tpu.memory_space<vmem>>, %arg3: memref<128x128xbf16, #tpu.memory_space<vmem>>, %arg4: memref<128x128xbf16, #tpu.memory_space<vmem>>, %arg5: memref<128x128xf32, #tpu.memory_space<vmem>>) attributes {dimension_semantics = [#tpu.dimension_semantics<parallel>, #tpu.dimension_semantics<arbitrary>], iteration_bounds = array<i64: 2, 1>, scalar_prefetch = 0 : i64, scratch_operands = 1 : i64, tpu.core_type = #tpu.core_type<tc>, window_params = [{transform_indices = @transform_0, window_bounds = array<i64: 128, 128>}, {transform_indices = @transform_1, window_bounds = array<i64: 128, 128>}, {transform_indices = @transform_2, window_bounds = array<i64: 128, 128>}]} {
    %c0_i32 = arith.constant 0 : i32
    %0 = arith.cmpi eq, %arg1, %c0_i32 : i32
    %1 = arith.extui %0 : i1 to i32
    %c0_i32_0 = arith.constant 0 : i32
    %2 = arith.cmpi ne, %1, %c0_i32_0 : i32
    scf.if %2 {
      %cst_10 = arith.constant 0.000000e+00 : f32
      %12 = vector.broadcast %cst_10 : f32 to vector<128x128xf32>
      %c0_11 = arith.constant 0 : index
      %c0_12 = arith.constant 0 : index
      %13 = vector.load %arg5[%c0_11, %c0_12] : memref<128x128xf32, #tpu.memory_space<vmem>>, vector<128x128xf32>
      tpu.vector_store %arg5[%c0_11, %c0_12], %12 {strides = array<i32>} : memref<128x128xf32, #tpu.memory_space<vmem>>, vector<128x128xf32>,
    } else {
    }
    %c0 = arith.constant 0 : index
    %c0_1 = arith.constant 0 : index
    %3 = vector.load %arg5[%c0, %c0_1] : memref<128x128xf32, #tpu.memory_space<vmem>>, vector<128x128xf32>
    %c0_2 = arith.constant 0 : index
    %c0_3 = arith.constant 0 : index
    %4 = vector.load %arg2[%c0_2, %c0_3] : memref<128x128xbf16, #tpu.memory_space<vmem>>, vector<128x128xbf16>
    %c0_4 = arith.constant 0 : index
    %c0_5 = arith.constant 0 : index
    %5 = vector.load %arg3[%c0_4, %c0_5] : memref<128x128xbf16, #tpu.memory_space<vmem>>, vector<128x128xbf16>
    %cst = arith.constant dense<0.000000e+00> : vector<128x128xf32>
    %6 = tpu.matmul %4, %5, %cst {dimension_numbers = #tpu.dot_dimension_numbers<[1], [0], [0], [1], [0, 0, 1, 1], [], []>} : vector<128x128xbf16>, vector<128x128xbf16>, vector<128x128xf32> -> vector<128x128xf32>
    %7 = arith.addf %3, %6 : vector<128x128xf32>
    %c0_6 = arith.constant 0 : index
    %c0_7 = arith.constant 0 : index
    %8 = vector.load %arg5[%c0_6, %c0_7] : memref<128x128xf32, #tpu.memory_space<vmem>>, vector<128x128xf32>
    tpu.vector_store %arg5[%c0_6, %c0_7], %7 {strides = array<i32>} : memref<128x128xf32, #tpu.memory_space<vmem>>, vector<128x128xf32>,
    %c0_i32_8 = arith.constant 0 : i32
    %9 = arith.cmpi eq, %arg1, %c0_i32_8 : i32
    %10 = arith.extui %9 : i1 to i32
    %c0_i32_9 = arith.constant 0 : i32
    %11 = arith.cmpi ne, %10, %c0_i32_9 : i32
    scf.if %11 {
      %c0_10 = arith.constant 0 : index
      %c0_11 = arith.constant 0 : index
      %12 = vector.load %arg5[%c0_10, %c0_11] : memref<128x128xf32, #tpu.memory_space<vmem>>, vector<128x128xf32>
      %13 = arith.truncf %12 : vector<128x128xf32> to vector<128x128xbf16>
      %c0_12 = arith.constant 0 : index
      %c0_13 = arith.constant 0 : index
      %14 = vector.load %arg4[%c0_12, %c0_13] : memref<128x128xbf16, #tpu.memory_space<vmem>>, vector<128x128xbf16>
      tpu.vector_store %arg4[%c0_12, %c0_13], %13 {strides = array<i32>} : memref<128x128xbf16, #tpu.memory_space<vmem>>, vector<128x128xbf16>,
    } else {
    }
    return
  }
  func.func @transform_0(%arg0: i32, %arg1: i32) -> (i32, i32) {
    %c0_i32 = arith.constant 0 : i32
    return %arg0, %arg1 : i32, i32
  }
  func.func @transform_1(%arg0: i32, %arg1: i32) -> (i32, i32) {
    %c0_i32 = arith.constant 0 : i32
    %c0_i32_0 = arith.constant 0 : i32
    return %arg1, %c0_i32 : i32, i32
  }
  func.func @transform_2(%arg0: i32, %arg1: i32) -> (i32, i32) {
    %c0_i32 = arith.constant 0 : i32
    %c0_i32_0 = arith.constant 0 : i32
    return %arg0, %c0_i32 : i32, i32
  }
}

</mosaic_0001>

<llo_original>
// kernel: tpu_custom_call.1
$region0: #{tpu_custom_call.1}
  #allocation0 [shape = 'u32[]', space=smem, size = 0x4, offset = 0x4, fixed_abs, tag = 'smem constant byte address 0x4 - core index']
  #allocation1 [shape = 'u32[144,128]{1,0:T(1,128)}', space=vmem, size = 0x12000, scoped, tag = 'internal scratch']
  #allocation2 [shape = 'f32[128,128]{1,0:T(8,128)}', space=vmem, size = 0x10000, scoped, tag = 'scratch operand']
  %s0 = inlined_call_operand.hbm [shape: bf16[256,128], index: 0, kind: input, shape index: {}]
  %s1 = inlined_call_operand.hbm [shape: bf16[128,128], index: 1, kind: input, shape index: {}]
  %s2 = inlined_call_operand.hbm [shape: bf16[256,128], index: 2, kind: output, shape index: {}]
  %s3 = sld [smem:[#allocation0]]
  $region57: #{tpu_custom_call.1} parent=0
    _
  %s5 = ssub.s32 1, %s3
  %s6 = scalar_select 0, %s5, %s3
  $region1: #{tpu_custom_call.1} parent=0
    #allocation3 [shape = 'u8[65536]{0}', space=vmem, size = 0x10000, scoped, tag = 'input window, operand 0']
    #allocation4 [shape = 's32[2]{0}', space=sflag, size = 0x8, scoped, tag = 'scoped memory for tpu_custom_call.1']
    #allocation5 [shape = 's32[2]{0}', space=sflag, size = 0x8, scoped, tag = 'scoped memory for tpu_custom_call.1']
    #allocation6 [shape = 'u8[32768]{0}', space=vmem, size = 0x8000, scoped, tag = 'input window, operand 1, single buffered']
    #allocation7 [shape = 's32[1]{0}', space=sflag, size = 0x4, scoped, tag = 'scoped memory for tpu_custom_call.1']
    #allocation8 [shape = 'u8[65536]{0}', space=vmem, size = 0x10000, scoped, tag = 'output window, operand 0']
    %7 = vsyncpa [#allocation4], 0
    %s8 = scalar_lea.sflag [#allocation4], 1
    %9 = vsyncpa %s8, 0
    %10 = vsyncpa [#allocation7], 0
    %11 = vsyncpa [#allocation5], 0
    %s12 = scalar_lea.sflag [#allocation5], 1
    %13 = vsyncpa %s12, 0
    loop: start=0, step=1, limit=4
    $region2: #{tpu_custom_call.1} parent=1 // loop_pre_header
      _
    $region3: #{tpu_custom_call.1} parent=1 // loop_header
      %s15 = sphi 0, %s19
      %p16 = scmp.ge.s32.totalorder %s15, 4
      %s22 = sphi 0, %s34
      %s23 = sphi 0, %s30
      %s24 = sphi 0, %s22
      %s25 = sphi 0, %s23
      %s26 = sphi 0, %s24
      %s27 = sphi 0, %s25
      %s39 = sphi 0, %s41
      %s42 = sphi 0, %s39
      %s43 = sphi 0, %s42
      %s59 = sphi 0, %s43
      %s65 = sphi 0, %s67
      %s68 = sphi 0, %s65
      %s69 = sphi 0, %s68
      %s85 = sphi 0, %s69
      %s91 = sphi 0, %s93
      %s94 = sphi 0, %s91
      %s95 = sphi 0, %s94
      %s111 = sphi 0, %s95
    $region4: #{tpu_custom_call.1} parent=1 // loop_header_branch
      %18 = sbr.rel (%p16) target = $region8
    $region5: #{tpu_custom_call.1} parent=1 // loop_body
      %s20 = ssub.s32 %s15, 1
      %s21 = ssub.s32 %s15, 2
      %s28 = sadd.s32 1, %s23
      %p29 = scmp.ge.s32.totalorder %s28, 1
      %s30 = scalar_select %p29, 0, %s28
      %s31 = sadd.s32 1, %s22
      %s32 = scalar_select %p29, %s31, %s22
      %p33 = scmp.ge.s32.totalorder %s32, 2
      %s34 = scalar_select %p33, 0, %s32
      %s35 = ssub.s32 %s22, %s34
      %s36 = ssub.s32 %s23, %s30
      %s37 = sor.u32 %s35, %s36
      %p38 = scmp.eq.s32.totalorder %s37, 0
      %s40 = sadd.s32 %s39, 1
      %s41 = scalar_select %p38, %s39, %s40
      %p44 = pneg %p38
      %p45 = scmp.eq.s32.totalorder %s15, 1
      %p46 = por %p44, %p45
      %p47 = scmp.ne.s32.totalorder %s39, %s42
      %p48 = scmp.eq.s32.totalorder %s15, 0
      %p49 = por %p47, %p48
      %p50 = scmp.ne.s32.totalorder %s39, %s42
      %p51 = scmp.eq.s32.totalorder %s20, 1
      %p52 = por %p50, %p51
      %p53 = scmp.ne.s32.totalorder %s42, %s43
      %p54 = scmp.eq.s32.totalorder %s20, 0
      %p55 = por %p53, %p54
      %p56 = scmp.ne.s32.totalorder %s42, %s43
      %p57 = scmp.eq.s32.totalorder %s21, 1
      %p58 = por %p56, %p57
      %p60 = scmp.ne.s32.totalorder %s43, %s59
      %p61 = scmp.eq.s32.totalorder %s21, 0
      %p62 = por %p60, %p61
      %s63 = ssub.s32 %s23, %s30
      %p64 = scmp.eq.s32.totalorder %s63, 0
      %s66 = sadd.s32 %s65, 1
      %s67 = scalar_select %p64, %s65, %s66
      %p70 = pneg %p64
      %p71 = scmp.eq.s32.totalorder %s15, 1
      %p72 = por %p70, %p71
      %p73 = scmp.ne.s32.totalorder %s65, %s68
      %p74 = scmp.eq.s32.totalorder %s15, 0
      %p75 = por %p73, %p74
      %p76 = scmp.ne.s32.totalorder %s65, %s68
      %p77 = scmp.eq.s32.totalorder %s20, 1
      %p78 = por %p76, %p77
      %p79 = scmp.ne.s32.totalorder %s68, %s69
      %p80 = scmp.eq.s32.totalorder %s20, 0
      %p81 = por %p79, %p80
      %p82 = scmp.ne.s32.totalorder %s68, %s69
      %p83 = scmp.eq.s32.totalorder %s21, 1
      %p84 = por %p82, %p83
      %p86 = scmp.ne.s32.totalorder %s69, %s85
      %p87 = scmp.eq.s32.totalorder %s21, 0
      %p88 = por %p86, %p87
      %s89 = ssub.s32 %s22, %s34
      %p90 = scmp.eq.s32.totalorder %s89, 0
      %s92 = sadd.s32 %s91, 1
      %s93 = scalar_select %p90, %s91, %s92
      %p96 = pneg %p90
      %p97 = scmp.eq.s32.totalorder %s15, 1
      %p98 = por %p96, %p97
      %p99 = scmp.ne.s32.totalorder %s91, %s94
      %p100 = scmp.eq.s32.totalorder %s15, 0
      %p101 = por %p99, %p100
      %p102 = scmp.ne.s32.totalorder %s91, %s94
      %p103 = scmp.eq.s32.totalorder %s20, 1
      %p104 = por %p102, %p103
      %p105 = scmp.ne.s32.totalorder %s94, %s95
      %p106 = scmp.eq.s32.totalorder %s20, 0
      %p107 = por %p105, %p106
      %p108 = scmp.ne.s32.totalorder %s94, %s95
      %p109 = scmp.eq.s32.totalorder %s21, 1
      %p110 = por %p108, %p109
      %p112 = scmp.ne.s32.totalorder %s95, %s111
      %p113 = scmp.eq.s32.totalorder %s21, 0
      %p114 = por %p112, %p113
      %p115 = scmp.le.s32.totalorder 1, %s15
      %p116 = scmp.lt.s32.totalorder %s15, 3
      %p117 = pnand %p115, %p116
      %p118 = pneg %p117
      // Predicated region
      $region9: #{tpu_custom_call.1} parent=5 // pred_check
        _
      $region10: #{tpu_custom_call.1} parent=5 // pred_check_branch
        %120 = sbr.rel (%p117) target = $region12
      $region11: #{tpu_custom_call.1} parent=5 // pred_region
        %s121 = ssub.s32 %s15, 1
        // Predicated region
        $region13: #{tpu_custom_call.1} parent=11 // pred_check
          %p122 = pneg %p81
        $region14: #{tpu_custom_call.1} parent=11 // pred_check_branch
          %124 = sbr.rel (%p122) target = $region16
        $region15: #{tpu_custom_call.1} parent=11 // pred_region
          %s125 = smul.u32 16, %s25
          %s127 = ssub.s32 1024, 1024
          %128 = vsyncadd [#allocation7], %s127
          %s129 = smul.addr %s125, 64
          %s130 = scalar_lea.hbm %s1, %s129
          %s131 = sshll.u32 [#allocation6], 4
          %s132 = int_to_ptr.vmem [resolvable:$true] %s131
          %137 = dma.hbm_to_vmem [thread:$0]  %s130, 1024, %s132, [#allocation7], 64, 64, 4
        $region16: #{tpu_custom_call.1} parent=11 // pred_fallthru
          _
      $region12: #{tpu_custom_call.1} parent=5 // pred_fallthru
        _
      %p138 = scmp.lt.s32.totalorder %s15, 2
      // Predicated region
      $region17: #{tpu_custom_call.1} parent=5 // pred_check
        %p139 = pneg %p138
      $region18: #{tpu_custom_call.1} parent=5 // pred_check_branch
        %141 = sbr.rel (%p139) target = $region20
      $region19: #{tpu_custom_call.1} parent=5 // pred_region
        // Predicated region
        $region21: #{tpu_custom_call.1} parent=19 // pred_check
          %p142 = pneg %p49
        $region22: #{tpu_custom_call.1} parent=19 // pred_check_branch
          %144 = sbr.rel (%p142) target = $region24
        $region23: #{tpu_custom_call.1} parent=19 // pred_region
          %s145 = sand.u32 %s39, 1
          %s146 = scalar_lea.sflag [#allocation4], %s145
          %s147 = sand.u32 %s39, 1
          %s148 = smul.addr %s147, 64
          %s149 = scalar_lea.vmem [#allocation3], %s148
          %s150 = smul.u32 16, %s22
          %s152 = ssub.s32 1024, 1024
          %153 = vsyncadd %s146, %s152
          %s154 = sadd.s32 %s23, %s150
          %s155 = smul.addr %s154, 64
          %s156 = scalar_lea.hbm %s0, %s155
          %s157 = sshll.u32 %s149, 4
          %s158 = int_to_ptr.vmem [resolvable:$true] %s157
          %163 = dma.hbm_to_vmem [thread:$0]  %s156, 1024, %s158, %s146, 64, 64, 4
        $region24: #{tpu_custom_call.1} parent=19 // pred_fallthru
          _
      $region20: #{tpu_custom_call.1} parent=5 // pred_fallthru
        _
      %p164 = scmp.le.s32.totalorder 1, %s15
      %p165 = scmp.lt.s32.totalorder %s15, 3
      %p166 = pnand %p164, %p165
      %p167 = pneg %p166
      // Predicated region
      $region25: #{tpu_custom_call.1} parent=5 // pred_check
        _
      $region26: #{tpu_custom_call.1} parent=5 // pred_check_branch
        %169 = sbr.rel (%p166) target = $region28
      $region27: #{tpu_custom_call.1} parent=5 // pred_region
        %s170 = ssub.s32 %s15, 1
        %s171 = sand.u32 %s42, 1
        %s172 = scalar_lea.sflag [#allocation4], %s171
        %s173 = sand.u32 %s42, 1
        %s174 = smul.addr %s173, 64
        %s175 = scalar_lea.vmem [#allocation3], %s174
        // Predicated region
        $region29: #{tpu_custom_call.1} parent=27 // pred_check
          %p176 = pneg %p55
        $region30: #{tpu_custom_call.1} parent=27 // pred_check_branch
          %178 = sbr.rel (%p176) target = $region32
        $region31: #{tpu_custom_call.1} parent=27 // pred_region
          %179 = dma.done %s172, 1024
        $region32: #{tpu_custom_call.1} parent=27 // pred_fallthru
          _
        // Predicated region
        $region33: #{tpu_custom_call.1} parent=27 // pred_check
          %p180 = pneg %p81
        $region34: #{tpu_custom_call.1} parent=27 // pred_check_branch
          %182 = sbr.rel (%p180) target = $region36
        $region35: #{tpu_custom_call.1} parent=27 // pred_region
          %183 = dma.done [#allocation7], 1024
        $region36: #{tpu_custom_call.1} parent=27 // pred_fallthru
          _
        %s184 = sand.u32 %s42, 1
        %s185 = scalar_lea.sflag [#allocation4], %s184
        %s186 = sand.u32 %s42, 1
        %s187 = smul.addr %s186, 64
        %s188 = scalar_lea.vmem [#allocation3], %s187
        %p189 = pneg %p55
        %p190 = pneg %p52
        %p191 = pneg %p81
        %p192 = pneg %p78
        %p193 = pneg %p107
        %p194 = pneg %p104
        %s195 = sand.u32 %s94, 1
        %s196 = scalar_lea.sflag [#allocation5], %s195
        %s197 = sand.u32 %s94, 1
        %s198 = smul.addr %s197, 64
        %s199 = scalar_lea.vmem [#allocation8], %s198
        %s200 = smul.u32 16, %s24
        %s201 = smul.u32 16, %s25
        %s202 = smul.u32 16, %s24
        %p204 = scmp.eq.s32.totalorder %s25, 0
        // Predicated region
        $region37: #{tpu_custom_call.1} parent=27 // pred_check
          %p205 = pneg %p204
        $region38: #{tpu_custom_call.1} parent=27 // pred_check_branch
          %207 = sbr.rel (%p205) target = $region40
        $region39: #{tpu_custom_call.1} parent=27 // pred_region
          %208 = vst [vmem:[#allocation2] sm:$0xff] 0.0
          %209 = vst [vmem:[#allocation2 + $0x8] sm:$0xff] 0.0
          %210 = vst [vmem:[#allocation2 + $0x10] sm:$0xff] 0.0
          %211 = vst [vmem:[#allocation2 + $0x18] sm:$0xff] 0.0
          %212 = vst [vmem:[#allocation2 + $0x20] sm:$0xff] 0.0
          %213 = vst [vmem:[#allocation2 + $0x28] sm:$0xff] 0.0
          %214 = vst [vmem:[#allocation2 + $0x30] sm:$0xff] 0.0
          %215 = vst [vmem:[#allocation2 + $0x38] sm:$0xff] 0.0
          %216 = vst [vmem:[#allocation2 + $0x40] sm:$0xff] 0.0
          %217 = vst [vmem:[#allocation2 + $0x48] sm:$0xff] 0.0
          %218 = vst [vmem:[#allocation2 + $0x50] sm:$0xff] 0.0
          %219 = vst [vmem:[#allocation2 + $0x58] sm:$0xff] 0.0
          %220 = vst [vmem:[#allocation2 + $0x60] sm:$0xff] 0.0
          %221 = vst [vmem:[#allocation2 + $0x68] sm:$0xff] 0.0
          %222 = vst [vmem:[#allocation2 + $0x70] sm:$0xff] 0.0
          %223 = vst [vmem:[#allocation2 + $0x78] sm:$0xff] 0.0
        $region40: #{tpu_custom_call.1} parent=27 // pred_fallthru
          _
        %v224 = vld [vmem:[#allocation2] sm:$0xff]
        %v225 = vld [vmem:[#allocation2 + $0x8] sm:$0xff]
        %v226 = vld [vmem:[#allocation2 + $0x10] sm:$0xff]
        %v227 = vld [vmem:[#allocation2 + $0x18] sm:$0xff]
        %v228 = vld [vmem:[#allocation2 + $0x20] sm:$0xff]
        %v229 = vld [vmem:[#allocation2 + $0x28] sm:$0xff]
        %v230 = vld [vmem:[#allocation2 + $0x30] sm:$0xff]
        %v231 = vld [vmem:[#allocation2 + $0x38] sm:$0xff]
        %v232 = vld [vmem:[#allocation2 + $0x40] sm:$0xff]
        %v233 = vld [vmem:[#allocation2 + $0x48] sm:$0xff]
        %v234 = vld [vmem:[#allocation2 + $0x50] sm:$0xff]
        %v235 = vld [vmem:[#allocation2 + $0x58] sm:$0xff]
        %v236 = vld [vmem:[#allocation2 + $0x60] sm:$0xff]
        %v237 = vld [vmem:[#allocation2 + $0x68] sm:$0xff]
        %v238 = vld [vmem:[#allocation2 + $0x70] sm:$0xff]
        %v239 = vld [vmem:[#allocation2 + $0x78] sm:$0xff]
        %v240 = vld [vmem:[%s175] sm:$0xf]
        %v241 = vld [vmem:[%s175 + $0x4] sm:$0xf]
        %v242 = vld [vmem:[%s175 + $0x8] sm:$0xf]
        %v243 = vld [vmem:[%s175 + $0xc] sm:$0xf]
        %v244 = vld [vmem:[%s175 + $0x10] sm:$0xf]
        %v245 = vld [vmem:[%s175 + $0x14] sm:$0xf]
        %v246 = vld [vmem:[%s175 + $0x18] sm:$0xf]
        %v247 = vld [vmem:[%s175 + $0x1c] sm:$0xf]
        %v248 = vld [vmem:[%s175 + $0x20] sm:$0xf]
        %v249 = vld [vmem:[%s175 + $0x24] sm:$0xf]
        %v250 = vld [vmem:[%s175 + $0x28] sm:$0xf]
        %v251 = vld [vmem:[%s175 + $0x2c] sm:$0xf]
        %v252 = vld [vmem:[%s175 + $0x30] sm:$0xf]
        %v253 = vld [vmem:[%s175 + $0x34] sm:$0xf]
        %v254 = vld [vmem:[%s175 + $0x38] sm:$0xf]
        %v255 = vld [vmem:[%s175 + $0x3c] sm:$0xf]
        %v256 = vld [vmem:[#allocation6] sm:$0xf]
        %v257 = vld [vmem:[#allocation6 + $0x4] sm:$0xf]
        %v258 = vld [vmem:[#allocation6 + $0x8] sm:$0xf]
        %v259 = vld [vmem:[#allocation6 + $0xc] sm:$0xf]
        %v260 = vld [vmem:[#allocation6 + $0x10] sm:$0xf]
        %v261 = vld [vmem:[#allocation6 + $0x14] sm:$0xf]
        %v262 = vld [vmem:[#allocation6 + $0x18] sm:$0xf]
        %v263 = vld [vmem:[#allocation6 + $0x1c] sm:$0xf]
        %v264 = vld [vmem:[#allocation6 + $0x20] sm:$0xf]
        %v265 = vld [vmem:[#allocation6 + $0x24] sm:$0xf]
        %v266 = vld [vmem:[#allocation6 + $0x28] sm:$0xf]
        %v267 = vld [vmem:[#allocation6 + $0x2c] sm:$0xf]
        %v268 = vld [vmem:[#allocation6 + $0x30] sm:$0xf]
        %v269 = vld [vmem:[#allocation6 + $0x34] sm:$0xf]
        %v270 = vld [vmem:[#allocation6 + $0x38] sm:$0xf]
        %v271 = vld [vmem:[#allocation6 + $0x3c] sm:$0xf]
        %v288 = vunpack.c.l.b16 %v240
        %v289 = vunpack.c.l.b16 %v241
        %v290 = vunpack.c.l.b16 %v242
        %v291 = vunpack.c.l.b16 %v243
        %v292 = vunpack.c.l.b16 %v244
        %v293 = vunpack.c.l.b16 %v245
        %v294 = vunpack.c.l.b16 %v246
        %v295 = vunpack.c.l.b16 %v247
        %v296 = vunpack.c.l.b16 %v248
        %v297 = vunpack.c.l.b16 %v249
        %v298 = vunpack.c.l.b16 %v250
        %v299 = vunpack.c.l.b16 %v251
        %v300 = vunpack.c.l.b16 %v252
        %v301 = vunpack.c.l.b16 %v253
        %v302 = vunpack.c.l.b16 %v254
        %v303 = vunpack.c.l.b16 %v255
        %v304 = vpack.c.b16 %v289, %v288
        %v305 = vpack.c.b16 %v291, %v290
        %v306 = vpack.c.b16 %v293, %v292
        %v307 = vpack.c.b16 %v295, %v294
        %v308 = vpack.c.b16 %v297, %v296
        %v309 = vpack.c.b16 %v299, %v298
        %v310 = vpack.c.b16 %v301, %v300
        %v311 = vpack.c.b16 %v303, %v302
        %v336 = vunpack.c.l.b16 %v256
        %v337 = vunpack.c.l.b16 %v257
        %v338 = vunpack.c.l.b16 %v258
        %v339 = vunpack.c.l.b16 %v259
        %v340 = vunpack.c.l.b16 %v260
        %v341 = vunpack.c.l.b16 %v261
        %v342 = vunpack.c.l.b16 %v262
        %v343 = vunpack.c.l.b16 %v263
        %v344 = vunpack.c.l.b16 %v264
        %v345 = vunpack.c.l.b16 %v265
        %v346 = vunpack.c.l.b16 %v266
        %v347 = vunpack.c.l.b16 %v267
        %v348 = vunpack.c.l.b16 %v268
        %v349 = vunpack.c.l.b16 %v269
        %v350 = vunpack.c.l.b16 %v270
        %v351 = vunpack.c.l.b16 %v271
        %v352 = vpack.c.b16 %v337, %v336
        %v353 = vpack.c.b16 %v339, %v338
        %v354 = vpack.c.b16 %v341, %v340
        %v355 = vpack.c.b16 %v343, %v342
        %v356 = vpack.c.b16 %v345, %v344
        %v357 = vpack.c.b16 %v347, %v346
        %v358 = vpack.c.b16 %v349, %v348
        %v359 = vpack.c.b16 %v351, %v350
        %368 = vmatprep.subr.bf16.mxu0 0
        %369 = vmatpush1.bf16.msra.mxu0 %v352
        %370 = vmatprep.subr.bf16.mxu0 0
        %371 = vmatpush1.bf16.msra.mxu0 %v353
        %372 = vmatprep.subr.bf16.mxu0 0
        %373 = vmatpush1.bf16.msra.mxu0 %v354
        %374 = vmatprep.subr.bf16.mxu0 0
        %375 = vmatpush1.bf16.msra.mxu0 %v355
        %376 = vmatprep.subr.bf16.mxu0 0
        %377 = vmatpush1.bf16.msra.mxu0 %v356
        %378 = vmatprep.subr.bf16.mxu0 0
        %379 = vmatpush1.bf16.msra.mxu0 %v357
        %380 = vmatprep.subr.bf16.mxu0 0
        %381 = vmatpush1.bf16.msra.mxu0 %v358
        %382 = vmatprep.subr.bf16.mxu0 0
        %383 = vmatpush1.bf16.msra.mxu0 %v359
        %384 = vmatprep.subr.bf16.mxu0 0
        %385 = vmatpush1.bf16.msra.mxu0 0
        %386 = vmatprep.subr.bf16.mxu0 0
        %387 = vmatpush1.bf16.msra.mxu0 0
        %388 = vmatprep.subr.bf16.mxu0 0
        %389 = vmatpush1.bf16.msra.mxu0 0
        %390 = vmatprep.subr.bf16.mxu0 0
        %391 = vmatpush1.bf16.msra.mxu0 0
        %392 = vmatprep.subr.bf16.mxu0 0
        %393 = vmatpush1.bf16.msra.mxu0 0
        %394 = vmatprep.subr.bf16.mxu0 0
        %395 = vmatpush1.bf16.msra.mxu0 0
        %396 = vmatprep.subr.bf16.mxu0 0
        %397 = vmatpush1.bf16.msra.mxu0 0
        %398 = vmatprep.subr.bf16.mxu0 0
        %399 = vmatpush1.bf16.msra.mxu0 0
        %400 = vmatprep.mubr.bf16.mxu0 0
        %401 = vmatmul.mubr.bf16.gmra.mrb[0].mxu0 %v304
        %v402 = vpop.f32.mrb[0].mxu0
        %v403 = vadd.f32 0.0, %v402
        %v404 = vpop.f32.mrb[0].mxu0
        %v405 = vpop.f32.mrb[0].mxu0
        %v406 = vadd.f32 0.0, %v405
        %v407 = vpop.f32.mrb[0].mxu0
        %408 = vmatprep.mubr.bf16.mxu0 0
        %409 = vmatmul.mubr.bf16.gmra.mrb[0].mxu0 %v305
        %v410 = vpop.f32.mrb[0].mxu0
        %v411 = vadd.f32 0.0, %v410
        %v412 = vpop.f32.mrb[0].mxu0
        %v413 = vpop.f32.mrb[0].mxu0
        %v414 = vadd.f32 0.0, %v413
        %v415 = vpop.f32.mrb[0].mxu0
        %416 = vmatprep.mubr.bf16.mxu0 0
        %417 = vmatmul.mubr.bf16.gmra.mrb[0].mxu0 %v306
        %v418 = vpop.f32.mrb[0].mxu0
        %v419 = vadd.f32 0.0, %v418
        %v420 = vpop.f32.mrb[0].mxu0
        %v421 = vpop.f32.mrb[0].mxu0
        %v422 = vadd.f32 0.0, %v421
        %v423 = vpop.f32.mrb[0].mxu0
        %424 = vmatprep.mubr.bf16.mxu0 0
        %425 = vmatmul.mubr.bf16.gmra.mrb[0].mxu0 %v307
        %v426 = vpop.f32.mrb[0].mxu0
        %v427 = vadd.f32 0.0, %v426
        %v428 = vpop.f32.mrb[0].mxu0
        %v429 = vpop.f32.mrb[0].mxu0
        %v430 = vadd.f32 0.0, %v429
        %v431 = vpop.f32.mrb[0].mxu0
        %432 = vmatprep.mubr.bf16.mxu0 0
        %433 = vmatmul.mubr.bf16.gmra.mrb[0].mxu0 %v308
        %v434 = vpop.f32.mrb[0].mxu0
        %v435 = vadd.f32 0.0, %v434
        %v436 = vpop.f32.mrb[0].mxu0
        %v437 = vpop.f32.mrb[0].mxu0
        %v438 = vadd.f32 0.0, %v437
        %v439 = vpop.f32.mrb[0].mxu0
        %440 = vmatprep.mubr.bf16.mxu0 0
        %441 = vmatmul.mubr.bf16.gmra.mrb[0].mxu0 %v309
        %v442 = vpop.f32.mrb[0].mxu0
        %v443 = vadd.f32 0.0, %v442
        %v444 = vpop.f32.mrb[0].mxu0
        %v445 = vpop.f32.mrb[0].mxu0
        %v446 = vadd.f32 0.0, %v445
        %v447 = vpop.f32.mrb[0].mxu0
        %448 = vmatprep.mubr.bf16.mxu0 0
        %449 = vmatmul.mubr.bf16.gmra.mrb[0].mxu0 %v310
        %v450 = vpop.f32.mrb[0].mxu0
        %v451 = vadd.f32 0.0, %v450
        %v452 = vpop.f32.mrb[0].mxu0
        %v453 = vpop.f32.mrb[0].mxu0
        %v454 = vadd.f32 0.0, %v453
        %v455 = vpop.f32.mrb[0].mxu0
        %456 = vmatprep.mubr.bf16.mxu0 0
        %457 = vmatmul.mubr.bf16.gmra.mrb[0].mxu0 %v311
        %v458 = vpop.f32.mrb[0].mxu0
        %v459 = vadd.f32 0.0, %v458
        %v460 = vpop.f32.mrb[0].mxu0
        %v461 = vpop.f32.mrb[0].mxu0
        %v462 = vadd.f32 0.0, %v461
        %v463 = vpop.f32.mrb[0].mxu0
        %464 = vdwg.mxu0
        %v465 = vadd.f32 %v224, %v403
        %v466 = vadd.f32 %v225, %v406
        %v467 = vadd.f32 %v226, %v411
        %v468 = vadd.f32 %v227, %v414
        %v469 = vadd.f32 %v228, %v419
        %v470 = vadd.f32 %v229, %v422
        %v471 = vadd.f32 %v230, %v427
        %v472 = vadd.f32 %v231, %v430
        %v473 = vadd.f32 %v232, %v435
        %v474 = vadd.f32 %v233, %v438
        %v475 = vadd.f32 %v234, %v443
        %v476 = vadd.f32 %v235, %v446
        %v477 = vadd.f32 %v236, %v451
        %v478 = vadd.f32 %v237, %v454
        %v479 = vadd.f32 %v238, %v459
        %v480 = vadd.f32 %v239, %v462
        %481 = vst [vmem:[#allocation2] sm:$0xff] %v465
        %482 = vst [vmem:[#allocation2 + $0x8] sm:$0xff] %v466
        %483 = vst [vmem:[#allocation2 + $0x10] sm:$0xff] %v467
        %484 = vst [vmem:[#allocation2 + $0x18] sm:$0xff] %v468
        %485 = vst [vmem:[#allocation2 + $0x20] sm:$0xff] %v469
        %486 = vst [vmem:[#allocation2 + $0x28] sm:$0xff] %v470
        %487 = vst [vmem:[#allocation2 + $0x30] sm:$0xff] %v471
        %488 = vst [vmem:[#allocation2 + $0x38] sm:$0xff] %v472
        %489 = vst [vmem:[#allocation2 + $0x40] sm:$0xff] %v473
        %490 = vst [vmem:[#allocation2 + $0x48] sm:$0xff] %v474
        %491 = vst [vmem:[#allocation2 + $0x50] sm:$0xff] %v475
        %492 = vst [vmem:[#allocation2 + $0x58] sm:$0xff] %v476
        %493 = vst [vmem:[#allocation2 + $0x60] sm:$0xff] %v477
        %494 = vst [vmem:[#allocation2 + $0x68] sm:$0xff] %v478
        %495 = vst [vmem:[#allocation2 + $0x70] sm:$0xff] %v479
        %496 = vst [vmem:[#allocation2 + $0x78] sm:$0xff] %v480
        // Predicated region
        $region41: #{tpu_custom_call.1} parent=27 // pred_check
          %p497 = pneg %p204
        $region42: #{tpu_custom_call.1} parent=27 // pred_check_branch
          %499 = sbr.rel (%p497) target = $region44
        $region43: #{tpu_custom_call.1} parent=27 // pred_region
          %v500 = vld [vmem:[#allocation2] sm:$0xff]
          %v501 = vld [vmem:[#allocation2 + $0x8] sm:$0xff]
          %v502 = vld [vmem:[#allocation2 + $0x10] sm:$0xff]
          %v503 = vld [vmem:[#allocation2 + $0x18] sm:$0xff]
          %v504 = vld [vmem:[#allocation2 + $0x20] sm:$0xff]
          %v505 = vld [vmem:[#allocation2 + $0x28] sm:$0xff]
          %v506 = vld [vmem:[#allocation2 + $0x30] sm:$0xff]
          %v507 = vld [vmem:[#allocation2 + $0x38] sm:$0xff]
          %v508 = vld [vmem:[#allocation2 + $0x40] sm:$0xff]
          %v509 = vld [vmem:[#allocation2 + $0x48] sm:$0xff]
          %v510 = vld [vmem:[#allocation2 + $0x50] sm:$0xff]
          %v511 = vld [vmem:[#allocation2 + $0x58] sm:$0xff]
          %v512 = vld [vmem:[#allocation2 + $0x60] sm:$0xff]
          %v513 = vld [vmem:[#allocation2 + $0x68] sm:$0xff]
          %v514 = vld [vmem:[#allocation2 + $0x70] sm:$0xff]
          %v515 = vld [vmem:[#allocation2 + $0x78] sm:$0xff]
          %v516 = vpack.c.bf16 %v501, %v500
          %v517 = vpack.c.bf16 %v503, %v502
          %v518 = vpack.c.bf16 %v505, %v504
          %v519 = vpack.c.bf16 %v507, %v506
          %v520 = vpack.c.bf16 %v509, %v508
          %v521 = vpack.c.bf16 %v511, %v510
          %v522 = vpack.c.bf16 %v513, %v512
          %v523 = vpack.c.bf16 %v515, %v514
          %v532 = vunpack.c.l.b16 %v516
          %v533 = vunpack.c.h.b16 %v516
          %v534 = vunpack.c.l.b16 %v517
          %v535 = vunpack.c.h.b16 %v517
          %v536 = vunpack.c.l.b16 %v518
          %v537 = vunpack.c.h.b16 %v518
          %v538 = vunpack.c.l.b16 %v519
          %v539 = vunpack.c.h.b16 %v519
          %v540 = vunpack.c.l.b16 %v520
          %v541 = vunpack.c.h.b16 %v520
          %v542 = vunpack.c.l.b16 %v521
          %v543 = vunpack.c.h.b16 %v521
          %v544 = vunpack.c.l.b16 %v522
          %v545 = vunpack.c.h.b16 %v522
          %v546 = vunpack.c.l.b16 %v523
          %v547 = vunpack.c.h.b16 %v523
          %v548 = vpack.c.b16 %v532, %v532
          %v549 = vpack.c.b16 %v533, %v533
          %v550 = vpack.c.b16 %v534, %v534
          %v551 = vpack.c.b16 %v535, %v535
          %v552 = vpack.c.b16 %v536, %v536
          %v553 = vpack.c.b16 %v537, %v537
          %v554 = vpack.c.b16 %v538, %v538
          %v555 = vpack.c.b16 %v539, %v539
          %v556 = vpack.c.b16 %v540, %v540
          %v557 = vpack.c.b16 %v541, %v541
          %v558 = vpack.c.b16 %v542, %v542
          %v559 = vpack.c.b16 %v543, %v543
          %v560 = vpack.c.b16 %v544, %v544
          %v561 = vpack.c.b16 %v545, %v545
          %v562 = vpack.c.b16 %v546, %v546
          %v563 = vpack.c.b16 %v547, %v547
          %580 = vst [vmem:[%s199] sm:$0xf] %v548
          %581 = vst [vmem:[%s199 + $0x4] sm:$0xf] %v549
          %582 = vst [vmem:[%s199 + $0x8] sm:$0xf] %v550
          %583 = vst [vmem:[%s199 + $0xc] sm:$0xf] %v551
          %584 = vst [vmem:[%s199 + $0x10] sm:$0xf] %v552
          %585 = vst [vmem:[%s199 + $0x14] sm:$0xf] %v553
          %586 = vst [vmem:[%s199 + $0x18] sm:$0xf] %v554
          %587 = vst [vmem:[%s199 + $0x1c] sm:$0xf] %v555
          %588 = vst [vmem:[%s199 + $0x20] sm:$0xf] %v556
          %589 = vst [vmem:[%s199 + $0x24] sm:$0xf] %v557
          %590 = vst [vmem:[%s199 + $0x28] sm:$0xf] %v558
          %591 = vst [vmem:[%s199 + $0x2c] sm:$0xf] %v559
          %592 = vst [vmem:[%s199 + $0x30] sm:$0xf] %v560
          %593 = vst [vmem:[%s199 + $0x34] sm:$0xf] %v561
          %594 = vst [vmem:[%s199 + $0x38] sm:$0xf] %v562
          %595 = vst [vmem:[%s199 + $0x3c] sm:$0xf] %v563
        $region44: #{tpu_custom_call.1} parent=27 // pred_fallthru
          _
        %s596 = sand.u32 %s94, 1
        %s597 = scalar_lea.sflag [#allocation5], %s596
        %s598 = sand.u32 %s94, 1
        %s599 = smul.addr %s598, 64
        %s600 = scalar_lea.vmem [#allocation8], %s599
        // Predicated region
        $region45: #{tpu_custom_call.1} parent=27 // pred_check
          %p601 = pneg %p104
        $region46: #{tpu_custom_call.1} parent=27 // pred_check_branch
          %603 = sbr.rel (%p601) target = $region48
        $region47: #{tpu_custom_call.1} parent=27 // pred_region
          %s604 = smul.u32 16, %s24
          %s606 = ssub.s32 1024, 1024
          %607 = vsyncadd %s597, %s606
          %s608 = smul.addr %s604, 64
          %s609 = scalar_lea.hbm %s2, %s608
          %s610 = sshll.u32 %s600, 4
          %s611 = int_to_ptr.vmem [resolvable:$true] %s610
          %616 = dma.vmem_to_hbm [thread:$0]  %s611, 1024, %s609, %s597, 64, 64, 4
        $region48: #{tpu_custom_call.1} parent=27 // pred_fallthru
          _
      $region28: #{tpu_custom_call.1} parent=5 // pred_fallthru
        _
      %p617 = scmp.le.s32.totalorder 2, %s15
      // Predicated region
      $region49: #{tpu_custom_call.1} parent=5 // pred_check
        %p618 = pneg %p617
      $region50: #{tpu_custom_call.1} parent=5 // pred_check_branch
        %620 = sbr.rel (%p618) target = $region52
      $region51: #{tpu_custom_call.1} parent=5 // pred_region
        %s621 = ssub.s32 %s15, 2
        // Predicated region
        $region53: #{tpu_custom_call.1} parent=51 // pred_check
          %p622 = pneg %p110
        $region54: #{tpu_custom_call.1} parent=51 // pred_check_branch
          %624 = sbr.rel (%p622) target = $region56
        $region55: #{tpu_custom_call.1} parent=51 // pred_region
          %s625 = sand.u32 %s95, 1
          %s626 = scalar_lea.sflag [#allocation5], %s625
          %s627 = sand.u32 %s95, 1
          %s628 = smul.addr %s627, 64
          %s629 = scalar_lea.vmem [#allocation8], %s628
          %630 = dma.done %s626, 1024
        $region56: #{tpu_custom_call.1} parent=51 // pred_fallthru
          _
      $region52: #{tpu_custom_call.1} parent=5 // pred_fallthru
        _
    $region6: #{tpu_custom_call.1} parent=1 // loop_footer
      %s19 = sadd.s32 1, %s15
    $region7: #{tpu_custom_call.1} parent=1 // loop_footer_branch
      %14 = sbr.rel target = $region3
    $region8: #{tpu_custom_call.1} parent=1 // loop_exit
      _
    %631 = vsyncpa [#allocation4], 1
    %s632 = scalar_lea.sflag [#allocation4], 1
    %633 = vsyncpa %s632, 1
    %634 = vsyncpa [#allocation7], 1
    %635 = vsyncpa [#allocation5], 1
    %s636 = scalar_lea.sflag [#allocation5], 1
    %637 = vsyncpa %s636, 1

</llo_original>
